<compile_context>
chip_gen: v5e
topology: v5e:2x2
jax: 0.10.0
libtpu: 0.0.40
codegen_flags: <defaults>
</compile_context>

<pallas_src>
import jax
import jax.numpy as jnp
from jax.experimental import pallas as pl
from jax.experimental.pallas import tpu as pltpu

_LANE = 128
_TARGET_STEP_BYTES = 16 << 20      # combined in+out VMEM bytes per grid step (~8 MiB each for f32)
_TARGET_STEPS = 8                  # minimum grid steps for real DMA/compute overlap
_MIN_PALLAS_ELEMS = 256 * 1024     # below ~1 MiB fused XLA elementwise is strictly faster


def _affine_kernel(a_ref, b_ref, x_ref, o_ref):
    # a_ref / b_ref: shape-(1,) f32 scalars in SMEM; x_ref / o_ref: (tile_r, width) VMEM tiles.
    # Compute in f32 (promote-then-compute, like PyTorch), cast only at the store.
    x = x_ref[...].astype(jnp.float32)
    o_ref[...] = (x * a_ref[0] + b_ref[0]).astype(o_ref.dtype)


def _choose_tile_rows(rows, width, in_itemsize, out_itemsize):
    """Pick a sublane-aligned row-tile size that (a) fits the per-step VMEM budget,
    (b) yields >= _TARGET_STEPS (even) grid steps when possible, and (c) prefers an
    exact divisor of rows to avoid a masked trailing block."""
    sub = max(8, 32 // in_itemsize)            # sublane packing: f32->8, bf16->16, int8/fp8->32
    if rows <= sub:
        return rows                            # single full-extent block (always tiling-legal)

    per_row_bytes = width * (in_itemsize + out_itemsize)
    budget_r = max(sub, (_TARGET_STEP_BYTES // per_row_bytes) // sub * sub)

    # Enough steps for overlap; even count so v7x's 2 TensorCores get an even split.
    steps = max(_TARGET_STEPS, -(-rows // budget_r))
    if steps % 2:
        steps += 1

    tile_r = -(-rows // steps)
    tile_r = ((tile_r + sub - 1) // sub) * sub     # align to sublane packing
    tile_r = max(sub, min(tile_r, budget_r))

    # Prefer an exact divisor (unmasked final store); never shrink more than ~2x.
    if rows % tile_r:
        t = tile_r
        lo = max(sub, tile_r // 2)
        while t >= lo:
            if rows % t == 0:
                return t
            t -= sub
    return tile_r


def dummy_model_forward(x, a, b, *, force_pallas=False):
    """y = x * a + b  (a, b are shape-(1,) parameters), matching DummyModel.forward."""
    orig_shape = x.shape
    out_dtype = jnp.result_type(x.dtype, a.dtype, b.dtype)
    n = x.size

    # Tiny inputs: pallas_call fixed overhead dwarfs the work. Non-128-divisible
    # element counts also fall back (padding/slice copies would double HBM traffic).
    # TODO(synk): handle non-128-divisible tails with an in-kernel masked store.
    if n == 0 or (not force_pallas and n < _MIN_PALLAS_ELEMS) or n % _LANE != 0:
        return (x.astype(jnp.float32) * a[0].astype(jnp.float32)
                + b[0].astype(jnp.float32)).astype(out_dtype)

    # Widest lane-dense slab width that divides n (pure reshape, no copy).
    width = _LANE
    for w in (1024, 512, 256):
        if n % w == 0:
            width = w
            break
    rows = n // width
    x2d = jnp.reshape(x, (rows, width))

    in_itemsize = jnp.dtype(x.dtype).itemsize
    out_itemsize = jnp.dtype(out_dtype).itemsize
    tile_r = _choose_tile_rows(rows, width, in_itemsize, out_itemsize)
    grid = (pl.cdiv(rows, tile_r),)

    # in + out tiles, double-buffered, plus headroom; capped for v7x's 64 MiB VMEM.
    tile_step_bytes = tile_r * width * (in_itemsize + out_itemsize)
    vmem_limit = int(min(48 << 20, max(16 << 20, 2 * tile_step_bytes + (4 << 20))))

    out2d = pl.pallas_call(
        _affine_kernel,
        out_shape=jax.ShapeDtypeStruct((rows, width), out_dtype),
        grid_spec=pltpu.PrefetchScalarGridSpec(
            num_scalar_prefetch=0,
            grid=grid,
            in_specs=[
                pl.BlockSpec(memory_space=pltpu.SMEM),            # a (f32 scalar param)
                pl.BlockSpec(memory_space=pltpu.SMEM),            # b (f32 scalar param)
                pl.BlockSpec((tile_r, width), lambda i: (i, 0)),  # x row-tile
            ],
            out_specs=pl.BlockSpec((tile_r, width), lambda i: (i, 0)),
        ),
        compiler_params=pltpu.CompilerParams(
            # Independent row tiles -> shardable across both v7x TensorCores.
            dimension_semantics=("parallel",),
            vmem_limit_bytes=vmem_limit,
        ),
    )(a.astype(jnp.float32), b.astype(jnp.float32), x2d)

    return jnp.reshape(out2d, orig_shape)


if __name__ == "__main__":
    key = jax.random.PRNGKey(0)
    kx, ka, kb, kx2 = jax.random.split(key, 4)

    # deterministic "randn(1)" parameters
    a = jax.random.normal(ka, (1,), dtype=jnp.float32)
    b = jax.random.normal(kb, (1,), dtype=jnp.float32)

    # small NCHW input consistent with an arbitrary-shape elementwise module;
    # force_pallas=True so the kernel path is exercised even at this tiny size.
    x = jax.random.normal(kx, (2, 4, 16, 16), dtype=jnp.float32)
    y = dummy_model_forward(x, a, b, force_pallas=True)
    y = jax.block_until_ready(y)
    y_ref = x * a + b
    assert jnp.allclose(y, y_ref, atol=1e-6, rtol=1e-6), "mismatch vs reference (small)"

    # moderate input to exercise the multi-step, double-buffered pipeline path.
    x2 = jax.random.normal(kx2, (4, 8, 128, 128), dtype=jnp.float32)
    y2 = dummy_model_forward(x2, a, b, force_pallas=True)
    y2 = jax.block_until_ready(y2)
    y2_ref = x2 * a + b
    assert jnp.allclose(y2, y2_ref, atol=1e-6, rtol=1e-6), "mismatch vs reference (pipelined)"

    print("KERNEL_OK")
</pallas_src>

<mosaic_0001>
module attributes {stable_mosaic.version = 11 : i64} {
  func.func @_affine_kernel(%arg0: i32, %arg1: memref<1xf32, #tpu.memory_space<smem>>, %arg2: memref<1xf32, #tpu.memory_space<smem>>, %arg3: memref<2x1024xf32, #tpu.memory_space<vmem>>, %arg4: memref<2x1024xf32, #tpu.memory_space<vmem>>) attributes {dimension_semantics = [#tpu.dimension_semantics<parallel>], iteration_bounds = array<i64: 1>, scalar_prefetch = 0 : i64, scratch_operands = 0 : i64, tpu.core_type = #tpu.core_type<tc>, window_params = [{transform_indices = @transform_0, window_bounds = array<i64: 1>}, {transform_indices = @transform_1, window_bounds = array<i64: 1>}, {transform_indices = @transform_2, window_bounds = array<i64: 2, 1024>}, {transform_indices = @transform_3, window_bounds = array<i64: 2, 1024>}]} {
    %c0 = arith.constant 0 : index
    %c0_0 = arith.constant 0 : index
    %0 = vector.load %arg3[%c0, %c0_0] : memref<2x1024xf32, #tpu.memory_space<vmem>>, vector<2x1024xf32>
    %c0_1 = arith.constant 0 : index
    %1 = memref.load %arg1[%c0_1] : memref<1xf32, #tpu.memory_space<smem>>
    %2 = vector.broadcast %1 : f32 to vector<2x1024xf32>
    %3 = arith.mulf %0, %2 : vector<2x1024xf32>
    %c0_2 = arith.constant 0 : index
    %4 = memref.load %arg2[%c0_2] : memref<1xf32, #tpu.memory_space<smem>>
    %5 = vector.broadcast %4 : f32 to vector<2x1024xf32>
    %6 = arith.addf %3, %5 : vector<2x1024xf32>
    %c0_3 = arith.constant 0 : index
    %c0_4 = arith.constant 0 : index
    %7 = vector.load %arg4[%c0_3, %c0_4] : memref<2x1024xf32, #tpu.memory_space<vmem>>, vector<2x1024xf32>
    tpu.vector_store %arg4[%c0_3, %c0_4], %6 {strides = array<i32>} : memref<2x1024xf32, #tpu.memory_space<vmem>>, vector<2x1024xf32>,
    return
  }
  func.func @transform_0(%arg0: i32) -> i32 {
    %c0_i32 = arith.constant 0 : i32
    %c0_i32_0 = arith.constant 0 : i32
    return %c0_i32 : i32
  }
  func.func @transform_1(%arg0: i32) -> i32 {
    %c0_i32 = arith.constant 0 : i32
    %c0_i32_0 = arith.constant 0 : i32
    return %c0_i32 : i32
  }
  func.func @transform_2(%arg0: i32) -> (i32, i32) {
    %c0_i32 = arith.constant 0 : i32
    %c0_i32_0 = arith.constant 0 : i32
    return %arg0, %c0_i32 : i32, i32
  }
  func.func @transform_3(%arg0: i32) -> (i32, i32) {
    %c0_i32 = arith.constant 0 : i32
    %c0_i32_0 = arith.constant 0 : i32
    return %arg0, %c0_i32 : i32, i32
  }
}

</mosaic_0001>

<llo_original>
// kernel: tpu_custom_call.1
$region0: #{tpu_custom_call.1}
  #allocation0 [shape = 'u32[]', space=smem, size = 0x4, offset = 0x4, fixed_abs, tag = 'smem constant byte address 0x4 - core index']
  #allocation1 [shape = 'u32[72,128]{1,0:T(1,128)}', space=vmem, size = 0x9000, scoped, tag = 'internal scratch']
  #allocation2 [shape = 'f32[1]{0:T(128)S(6)}', space=smem, size = 0x200, scoped, tag = 'scoped memory for tpu_custom_call.1']
  #allocation3 [shape = 'f32[1]{0:T(128)S(6)}', space=smem, size = 0x200, scoped, tag = 'scoped memory for tpu_custom_call.1']
  %s0 = inlined_call_operand.<no memory space> [shape: f32[1], index: 0, kind: input, shape index: {}]
  %s1 = inlined_call_operand.<no memory space> [shape: f32[1], index: 1, kind: input, shape index: {}]
  %s2 = inlined_call_operand.hbm [shape: f32[2,1024], index: 2, kind: input, shape index: {}]
  %s3 = inlined_call_operand.hbm [shape: f32[2,1024], index: 3, kind: output, shape index: {}]
  %s4 = sld [smem:[#allocation0]]
  $region26: #{tpu_custom_call.1} parent=0
    _
  %s6 = ssub.s32 1, %s4
  %s7 = scalar_select 0, %s6, %s4
  %8 = sst [smem:[#allocation2]] %s0
  %9 = sst [smem:[#allocation3]] %s1
  $region1: #{tpu_custom_call.1} parent=0
    #allocation4 [shape = 'u8[8192]{0}', space=vmem, size = 0x2000, scoped, tag = 'input window, operand 2, single buffered']
    #allocation5 [shape = 's32[1]{0}', space=sflag, size = 0x4, scoped, tag = 'scoped memory for tpu_custom_call.1']
    #allocation6 [shape = 's32[1]{0}', space=sflag, size = 0x4, scoped, tag = 'scoped memory for tpu_custom_call.1']
    #allocation7 [shape = 'u8[8192]{0}', space=vmem, size = 0x2000, scoped, tag = 'output window, operand 0, single buffered']
    %10 = vsyncpa [#allocation5], 0
    %11 = vsyncpa [#allocation6], 0
    // Predicated region
    $region2: #{tpu_custom_call.1} parent=1 // pred_check
      _
    $region3: #{tpu_custom_call.1} parent=1 // pred_check_branch
      %13 = sbr.rel (0) target = $region5
    $region4: #{tpu_custom_call.1} parent=1 // pred_region
      _
    $region5: #{tpu_custom_call.1} parent=1 // pred_fallthru
      _
    // Predicated region
    $region6: #{tpu_custom_call.1} parent=1 // pred_check
      _
    $region7: #{tpu_custom_call.1} parent=1 // pred_check_branch
      %15 = sbr.rel (0) target = $region9
    $region8: #{tpu_custom_call.1} parent=1 // pred_region
      _
    $region9: #{tpu_custom_call.1} parent=1 // pred_fallthru
      _
    // Predicated region
    $region10: #{tpu_custom_call.1} parent=1 // pred_check
      _
    $region11: #{tpu_custom_call.1} parent=1 // pred_check_branch
      %17 = sbr.rel (0) target = $region13
    $region12: #{tpu_custom_call.1} parent=1 // pred_region
      %19 = vsyncadd [#allocation5], 0
      %s21 = sshll.u32 %s2, 4
      %s22 = int_to_ptr.hbm [resolvable:$true] %s21
      %s23 = sshll.u32 [#allocation4], 4
      %s24 = int_to_ptr.vmem [resolvable:$true] %s23
      %26 = dma.hbm_to_vmem [thread:$0]  %s22, 256, %s24, [#allocation5]
    $region13: #{tpu_custom_call.1} parent=1 // pred_fallthru
      _
    // Predicated region
    $region14: #{tpu_custom_call.1} parent=1 // pred_check
      _
    $region15: #{tpu_custom_call.1} parent=1 // pred_check_branch
      %28 = sbr.rel (0) target = $region17
    $region16: #{tpu_custom_call.1} parent=1 // pred_region
      %30 = dma.done [#allocation5], 256
    $region17: #{tpu_custom_call.1} parent=1 // pred_fallthru
      _
    %v31 = vld [vmem:[#allocation4] sm:$0xff]
    %v32 = vld [vmem:[#allocation4 + $0x8] sm:$0xff]
    %s33 = sld [smem:[#allocation2]]
    %v34 = vstv %s33
    %v35 = vmul.f32 %v31, %v34
    %v36 = vmul.f32 %v32, %v34
    %s37 = sld [smem:[#allocation3]]
    %v38 = vstv %s37
    %v39 = vadd.f32 %v35, %v38
    %v40 = vadd.f32 %v36, %v38
    %41 = vst [vmem:[#allocation7] sm:$0xff] %v39
    %42 = vst [vmem:[#allocation7 + $0x8] sm:$0xff] %v40
    // Predicated region
    $region18: #{tpu_custom_call.1} parent=1 // pred_check
      _
    $region19: #{tpu_custom_call.1} parent=1 // pred_check_branch
      %44 = sbr.rel (0) target = $region21
    $region20: #{tpu_custom_call.1} parent=1 // pred_region
      %46 = vsyncadd [#allocation6], 0
      %s48 = sshll.u32 [#allocation7], 4
      %s49 = int_to_ptr.vmem [resolvable:$true] %s48
      %s50 = sshll.u32 %s3, 4
      %s51 = int_to_ptr.hbm [resolvable:$true] %s50
      %53 = dma.vmem_to_hbm [thread:$0]  %s49, 256, %s51, [#allocation6]
    $region21: #{tpu_custom_call.1} parent=1 // pred_fallthru
      _
    // Predicated region
    $region22: #{tpu_custom_call.1} parent=1 // pred_check
      _
    $region23: #{tpu_custom_call.1} parent=1 // pred_check_branch
      %55 = sbr.rel (0) target = $region25
    $region24: #{tpu_custom_call.1} parent=1 // pred_region
      %57 = dma.done [#allocation6], 256
    $region25: #{tpu_custom_call.1} parent=1 // pred_fallthru
      _
    %58 = vsyncpa [#allocation5], 1
    %59 = vsyncpa [#allocation6], 1

</llo_original>
